<compile_context>
chip_gen: v5e
topology: v5e:2x2
jax: 0.10.0
libtpu: 0.0.40
codegen_flags: <defaults>
</compile_context>

<pallas_src>
import functools

import jax
import jax.numpy as jnp
from jax.experimental import pallas as pl
from jax.experimental.pallas import tpu as pltpu


def _cheb_kernel(attn_ref, x_ref, theta_ref, out_ref, *, bf16_matmul: bool):
    """Single grid step — whole forward pass.

    attn_ref : (B, B)              VMEM
    x_ref    : (B, F_in)           VMEM
    theta_ref: (K, F_in, F_out)    VMEM (full parameter tensor)
    out_ref  : (B, F_out)          VMEM
    """
    # sum_k Theta[k] — K-1 cheap VPU adds (K is static: unrolled Python loop so
    # the LLO scheduler sees straight-line vector adds, no cross-dim reduce).
    k_order = theta_ref.shape[0]
    theta_sum = theta_ref[0]
    for k in range(1, k_order):
        theta_sum = theta_sum + theta_ref[k]

    # rhs = spatial_attention @ x
    rhs = jnp.dot(attn_ref[...], x_ref[...], preferred_element_type=jnp.float32)

    if bf16_matmul:
        # bf16-native MXU path (v6e / v7x): bf16 inputs, f32 accumulation.
        out_ref[...] = jnp.dot(
            rhs.astype(jnp.bfloat16),
            theta_sum.astype(jnp.bfloat16),
            preferred_element_type=jnp.float32,
        )
    else:
        out_ref[...] = jnp.dot(rhs, theta_sum, preferred_element_type=jnp.float32)


def cheb_conv_K_forward(x, spatial_attention, theta, *, bf16_matmul: bool = False):
    """Pallas implementation of cheb_conv_K.forward.

    x:                 (B, F_in)            float32
    spatial_attention: (B, B)               float32
    theta:             (K, F_in, F_out)     float32, with F_out == F_in
    returns:           (B, F_out)           float32
    """
    B, F_in = x.shape
    K, F_in_t, F_out = theta.shape
    assert F_in_t == F_in and F_out == F_in, "module requires F_out == F_in"
    assert spatial_attention.shape == (B, B)

    kernel = functools.partial(_cheb_kernel, bf16_matmul=bf16_matmul)

    return pl.pallas_call(
        kernel,
        out_shape=jax.ShapeDtypeStruct((B, F_out), jnp.float32),
        grid_spec=pltpu.PrefetchScalarGridSpec(
            num_scalar_prefetch=0,
            grid=(1,),  # single step — whole problem fits in VMEM
            in_specs=[
                pl.BlockSpec((B, B), lambda i: (0, 0)),               # attn (full)
                pl.BlockSpec((B, F_in), lambda i: (0, 0)),            # x    (full)
                pl.BlockSpec((K, F_in, F_out), lambda i: (0, 0, 0)),  # Theta (full)
            ],
            out_specs=pl.BlockSpec((B, F_out), lambda i: (0, 0)),
        ),
        compiler_params=pltpu.CompilerParams(
            dimension_semantics=("arbitrary",),
        ),
    )(spatial_attention, x, theta)


if __name__ == "__main__":
    # Small, deterministic example consistent with the module's forward:
    #   x: (batch_size, F_in), attention: (batch_size, batch_size)
    K = 3
    B = 8          # batch_size
    F = 128        # in_channels == out_channels == F_in

    key = jax.random.PRNGKey(0)
    kx, ka, kt = jax.random.split(key, 3)

    x = jax.random.normal(kx, (B, F), dtype=jnp.float32)
    spatial_attention = jax.random.normal(ka, (B, B), dtype=jnp.float32)
    # Deterministic parameter init for Theta (shape (K, in_channels, out_channels)).
    theta = 0.1 * jax.random.normal(kt, (K, F, F), dtype=jnp.float32)

    # Pure-JAX reference of the exact PyTorch semantics.
    rhs = spatial_attention @ x
    ref = jnp.zeros_like(x)
    for k in range(K):
        ref = ref + rhs @ theta[k]

    # f32 path (default) — tight tolerance.
    out = jax.block_until_ready(cheb_conv_K_forward(x, spatial_attention, theta))
    assert out.shape == (B, F)
    assert jnp.allclose(out, ref, atol=1e-4, rtol=1e-4)

    # bf16-input / f32-accumulate fast path (v6e / v7x MXU) — looser tolerance.
    out_bf16 = jax.block_until_ready(
        cheb_conv_K_forward(x, spatial_attention, theta, bf16_matmul=True)
    )
    assert jnp.allclose(out_bf16, ref, atol=1e-1, rtol=5e-2)

    print("KERNEL_OK")
</pallas_src>

<mosaic_0001>
module attributes {stable_mosaic.version = 11 : i64} {
  func.func @_cheb_kernel(%arg0: i32, %arg1: memref<8x8xf32, #tpu.memory_space<vmem>>, %arg2: memref<8x128xf32, #tpu.memory_space<vmem>>, %arg3: memref<3x128x128xf32, #tpu.memory_space<vmem>>, %arg4: memref<8x128xf32, #tpu.memory_space<vmem>>) attributes {dimension_semantics = [#tpu.dimension_semantics<arbitrary>], iteration_bounds = array<i64: 1>, scalar_prefetch = 0 : i64, scratch_operands = 0 : i64, tpu.core_type = #tpu.core_type<tc>, window_params = [{pipeline_mode = #tpu.pipeline_mode<synchronous>, transform_indices = @transform_0, window_bounds = array<i64: 8, 8>}, {pipeline_mode = #tpu.pipeline_mode<synchronous>, transform_indices = @transform_1, window_bounds = array<i64: 8, 128>}, {pipeline_mode = #tpu.pipeline_mode<synchronous>, transform_indices = @transform_2, window_bounds = array<i64: 3, 128, 128>}, {pipeline_mode = #tpu.pipeline_mode<synchronous>, transform_indices = @transform_3, window_bounds = array<i64: 8, 128>}]} {
    %c0 = arith.constant 0 : index
    %c0_0 = arith.constant 0 : index
    %c0_1 = arith.constant 0 : index
    %0 = vector.load %arg3[%c0, %c0_0, %c0_1] : memref<3x128x128xf32, #tpu.memory_space<vmem>>, vector<1x128x128xf32>
    %1 = vector.shape_cast %0 : vector<1x128x128xf32> to vector<128x128xf32>
    %c1 = arith.constant 1 : index
    %c0_2 = arith.constant 0 : index
    %c0_3 = arith.constant 0 : index
    %2 = vector.load %arg3[%c1, %c0_2, %c0_3] : memref<3x128x128xf32, #tpu.memory_space<vmem>>, vector<1x128x128xf32>
    %3 = vector.shape_cast %2 : vector<1x128x128xf32> to vector<128x128xf32>
    %4 = arith.addf %1, %3 : vector<128x128xf32>
    %c2 = arith.constant 2 : index
    %c0_4 = arith.constant 0 : index
    %c0_5 = arith.constant 0 : index
    %5 = vector.load %arg3[%c2, %c0_4, %c0_5] : memref<3x128x128xf32, #tpu.memory_space<vmem>>, vector<1x128x128xf32>
    %6 = vector.shape_cast %5 : vector<1x128x128xf32> to vector<128x128xf32>
    %7 = arith.addf %4, %6 : vector<128x128xf32>
    %c0_6 = arith.constant 0 : index
    %c0_7 = arith.constant 0 : index
    %8 = vector.load %arg1[%c0_6, %c0_7] : memref<8x8xf32, #tpu.memory_space<vmem>>, vector<8x8xf32>
    %c0_8 = arith.constant 0 : index
    %c0_9 = arith.constant 0 : index
    %9 = vector.load %arg2[%c0_8, %c0_9] : memref<8x128xf32, #tpu.memory_space<vmem>>, vector<8x128xf32>
    %cst = arith.constant dense<0.000000e+00> : vector<8x128xf32>
    %10 = tpu.matmul %8, %9, %cst {dimension_numbers = #tpu.dot_dimension_numbers<[1], [0], [0], [1], [0, 0, 1, 1], [], []>} : vector<8x8xf32>, vector<8x128xf32>, vector<8x128xf32> -> vector<8x128xf32>
    %cst_10 = arith.constant dense<0.000000e+00> : vector<8x128xf32>
    %11 = tpu.matmul %10, %7, %cst_10 {dimension_numbers = #tpu.dot_dimension_numbers<[1], [0], [0], [1], [0, 0, 1, 1], [], []>} : vector<8x128xf32>, vector<128x128xf32>, vector<8x128xf32> -> vector<8x128xf32>
    %c0_11 = arith.constant 0 : index
    %c0_12 = arith.constant 0 : index
    %12 = vector.load %arg4[%c0_11, %c0_12] : memref<8x128xf32, #tpu.memory_space<vmem>>, vector<8x128xf32>
    tpu.vector_store %arg4[%c0_11, %c0_12], %11 {strides = array<i32>} : memref<8x128xf32, #tpu.memory_space<vmem>>, vector<8x128xf32>,
    return
  }
  func.func @transform_0(%arg0: i32) -> (i32, i32) {
    %c0_i32 = arith.constant 0 : i32
    %c0_i32_0 = arith.constant 0 : i32
    %c0_i32_1 = arith.constant 0 : i32
    return %c0_i32, %c0_i32_0 : i32, i32
  }
  func.func @transform_1(%arg0: i32) -> (i32, i32) {
    %c0_i32 = arith.constant 0 : i32
    %c0_i32_0 = arith.constant 0 : i32
    %c0_i32_1 = arith.constant 0 : i32
    return %c0_i32, %c0_i32_0 : i32, i32
  }
  func.func @transform_2(%arg0: i32) -> (i32, i32, i32) {
    %c0_i32 = arith.constant 0 : i32
    %c0_i32_0 = arith.constant 0 : i32
    %c0_i32_1 = arith.constant 0 : i32
    %c0_i32_2 = arith.constant 0 : i32
    return %c0_i32, %c0_i32_0, %c0_i32_1 : i32, i32, i32
  }
  func.func @transform_3(%arg0: i32) -> (i32, i32) {
    %c0_i32 = arith.constant 0 : i32
    %c0_i32_0 = arith.constant 0 : i32
    %c0_i32_1 = arith.constant 0 : i32
    return %c0_i32, %c0_i32_0 : i32, i32
  }
}

</mosaic_0001>

<llo_original>
// kernel: tpu_custom_call.1
$region0: #{tpu_custom_call.1}
  #allocation0 [shape = 'u32[]', space=smem, size = 0x4, offset = 0x4, fixed_abs, tag = 'smem constant byte address 0x4 - core index']
  #allocation1 [shape = 'u32[72,128]{1,0:T(1,128)}', space=vmem, size = 0x9000, scoped, tag = 'internal scratch']
  %s0 = inlined_call_operand.hbm [shape: f32[8,8], index: 0, kind: input, shape index: {}]
  %s1 = inlined_call_operand.hbm [shape: f32[8,128], index: 1, kind: input, shape index: {}]
  %s2 = inlined_call_operand.hbm [shape: f32[3,128,128], index: 2, kind: input, shape index: {}]
  %s3 = inlined_call_operand.hbm [shape: f32[8,128], index: 3, kind: output, shape index: {}]
  %s4 = sld [smem:[#allocation0]]
  $region34: #{tpu_custom_call.1} parent=0
    _
  %s6 = ssub.s32 1, %s4
  %s7 = scalar_select 0, %s6, %s4
  $region1: #{tpu_custom_call.1} parent=0
    #allocation2 [shape = 'u8[4096]{0}', space=vmem, size = 0x1000, scoped, tag = 'input window, operand 0, single buffered']
    #allocation3 [shape = 's32[1]{0}', space=sflag, size = 0x4, scoped, tag = 'scoped memory for tpu_custom_call.1']
    #allocation4 [shape = 's32[1]{0}', space=sflag, size = 0x4, scoped, tag = 'scoped memory for tpu_custom_call.1']
    #allocation5 [shape = 'u8[4096]{0}', space=vmem, size = 0x1000, scoped, tag = 'input window, operand 1, single buffered']
    #allocation6 [shape = 's32[1]{0}', space=sflag, size = 0x4, scoped, tag = 'scoped memory for tpu_custom_call.1']
    #allocation7 [shape = 'u8[196608]{0}', space=vmem, size = 0x30000, scoped, tag = 'input window, operand 2, single buffered']
    #allocation8 [shape = 'u8[4096]{0}', space=vmem, size = 0x1000, scoped, tag = 'output window, operand 0, single buffered']
    %8 = vsyncpa [#allocation3], 0
    %9 = vsyncpa [#allocation6], 0
    %10 = vsyncpa [#allocation4], 0
    // Predicated region
    $region2: #{tpu_custom_call.1} parent=1 // pred_check
      _
    $region3: #{tpu_custom_call.1} parent=1 // pred_check_branch
      %12 = sbr.rel (0) target = $region5
    $region4: #{tpu_custom_call.1} parent=1 // pred_region
      %14 = vsyncadd [#allocation3], 0
      %s16 = sshll.u32 %s0, 4
      %s17 = int_to_ptr.hbm [resolvable:$true] %s16
      %s18 = sshll.u32 [#allocation2], 4
      %s19 = int_to_ptr.vmem [resolvable:$true] %s18
      %21 = dma.hbm_to_vmem [thread:$0]  %s17, 128, %s19, [#allocation3]
    $region5: #{tpu_custom_call.1} parent=1 // pred_fallthru
      _
    // Predicated region
    $region6: #{tpu_custom_call.1} parent=1 // pred_check
      _
    $region7: #{tpu_custom_call.1} parent=1 // pred_check_branch
      %23 = sbr.rel (0) target = $region9
    $region8: #{tpu_custom_call.1} parent=1 // pred_region
      %25 = vsyncadd [#allocation6], 0
      %s27 = sshll.u32 %s1, 4
      %s28 = int_to_ptr.hbm [resolvable:$true] %s27
      %s29 = sshll.u32 [#allocation5], 4
      %s30 = int_to_ptr.vmem [resolvable:$true] %s29
      %32 = dma.hbm_to_vmem [thread:$0]  %s28, 128, %s30, [#allocation6]
    $region9: #{tpu_custom_call.1} parent=1 // pred_fallthru
      _
    // Predicated region
    $region10: #{tpu_custom_call.1} parent=1 // pred_check
      _
    $region11: #{tpu_custom_call.1} parent=1 // pred_check_branch
      %34 = sbr.rel (0) target = $region13
    $region12: #{tpu_custom_call.1} parent=1 // pred_region
      %36 = vsyncadd [#allocation6], 0
      %s37 = sshll.u32 %s2, 4
      %s38 = int_to_ptr.hbm [resolvable:$true] %s37
      %s39 = sshll.u32 [#allocation7], 4
      %s40 = int_to_ptr.vmem [resolvable:$true] %s39
      %45 = dma.hbm_to_vmem [thread:$0]  %s38, 6144, %s40, [#allocation6], 128, 128, 8
    $region13: #{tpu_custom_call.1} parent=1 // pred_fallthru
      _
    // Predicated region
    $region14: #{tpu_custom_call.1} parent=1 // pred_check
      _
    $region15: #{tpu_custom_call.1} parent=1 // pred_check_branch
      %47 = sbr.rel (0) target = $region17
    $region16: #{tpu_custom_call.1} parent=1 // pred_region
      %49 = dma.done [#allocation3], 128
    $region17: #{tpu_custom_call.1} parent=1 // pred_fallthru
      _
    // Predicated region
    $region18: #{tpu_custom_call.1} parent=1 // pred_check
      _
    $region19: #{tpu_custom_call.1} parent=1 // pred_check_branch
      %51 = sbr.rel (0) target = $region21
    $region20: #{tpu_custom_call.1} parent=1 // pred_region
      %53 = dma.done [#allocation6], 128
    $region21: #{tpu_custom_call.1} parent=1 // pred_fallthru
      _
    // Predicated region
    $region22: #{tpu_custom_call.1} parent=1 // pred_check
      _
    $region23: #{tpu_custom_call.1} parent=1 // pred_check_branch
      %55 = sbr.rel (0) target = $region25
    $region24: #{tpu_custom_call.1} parent=1 // pred_region
      %57 = dma.done [#allocation6], 6144
    $region25: #{tpu_custom_call.1} parent=1 // pred_fallthru
      _
    %v58 = vld [vmem:[#allocation7] sm:$0xff]
    %v59 = vld [vmem:[#allocation7 + $0x8] sm:$0xff]
    %v60 = vld [vmem:[#allocation7 + $0x10] sm:$0xff]
    %v61 = vld [vmem:[#allocation7 + $0x18] sm:$0xff]
    %v62 = vld [vmem:[#allocation7 + $0x20] sm:$0xff]
    %v63 = vld [vmem:[#allocation7 + $0x28] sm:$0xff]
    %v64 = vld [vmem:[#allocation7 + $0x30] sm:$0xff]
    %v65 = vld [vmem:[#allocation7 + $0x38] sm:$0xff]
    %v66 = vld [vmem:[#allocation7 + $0x40] sm:$0xff]
    %v67 = vld [vmem:[#allocation7 + $0x48] sm:$0xff]
    %v68 = vld [vmem:[#allocation7 + $0x50] sm:$0xff]
    %v69 = vld [vmem:[#allocation7 + $0x58] sm:$0xff]
    %v70 = vld [vmem:[#allocation7 + $0x60] sm:$0xff]
    %v71 = vld [vmem:[#allocation7 + $0x68] sm:$0xff]
    %v72 = vld [vmem:[#allocation7 + $0x70] sm:$0xff]
    %v73 = vld [vmem:[#allocation7 + $0x78] sm:$0xff]
    %s74 = scalar_lea.vmem [#allocation7], 128
    %v75 = vld [vmem:[%s74] sm:$0xff]
    %v76 = vld [vmem:[%s74 + $0x8] sm:$0xff]
    %v77 = vld [vmem:[%s74 + $0x10] sm:$0xff]
    %v78 = vld [vmem:[%s74 + $0x18] sm:$0xff]
    %v79 = vld [vmem:[%s74 + $0x20] sm:$0xff]
    %v80 = vld [vmem:[%s74 + $0x28] sm:$0xff]
    %v81 = vld [vmem:[%s74 + $0x30] sm:$0xff]
    %v82 = vld [vmem:[%s74 + $0x38] sm:$0xff]
    %v83 = vld [vmem:[%s74 + $0x40] sm:$0xff]
    %v84 = vld [vmem:[%s74 + $0x48] sm:$0xff]
    %v85 = vld [vmem:[%s74 + $0x50] sm:$0xff]
    %v86 = vld [vmem:[%s74 + $0x58] sm:$0xff]
    %v87 = vld [vmem:[%s74 + $0x60] sm:$0xff]
    %v88 = vld [vmem:[%s74 + $0x68] sm:$0xff]
    %v89 = vld [vmem:[%s74 + $0x70] sm:$0xff]
    %v90 = vld [vmem:[%s74 + $0x78] sm:$0xff]
    %v91 = vadd.f32 %v58, %v75
    %v92 = vadd.f32 %v59, %v76
    %v93 = vadd.f32 %v60, %v77
    %v94 = vadd.f32 %v61, %v78
    %v95 = vadd.f32 %v62, %v79
    %v96 = vadd.f32 %v63, %v80
    %v97 = vadd.f32 %v64, %v81
    %v98 = vadd.f32 %v65, %v82
    %v99 = vadd.f32 %v66, %v83
    %v100 = vadd.f32 %v67, %v84
    %v101 = vadd.f32 %v68, %v85
    %v102 = vadd.f32 %v69, %v86
    %v103 = vadd.f32 %v70, %v87
    %v104 = vadd.f32 %v71, %v88
    %v105 = vadd.f32 %v72, %v89
    %v106 = vadd.f32 %v73, %v90
    %s107 = scalar_lea.vmem [#allocation7], 256
    %v108 = vld [vmem:[%s107] sm:$0xff]
    %v109 = vld [vmem:[%s107 + $0x8] sm:$0xff]
    %v110 = vld [vmem:[%s107 + $0x10] sm:$0xff]
    %v111 = vld [vmem:[%s107 + $0x18] sm:$0xff]
    %v112 = vld [vmem:[%s107 + $0x20] sm:$0xff]
    %v113 = vld [vmem:[%s107 + $0x28] sm:$0xff]
    %v114 = vld [vmem:[%s107 + $0x30] sm:$0xff]
    %v115 = vld [vmem:[%s107 + $0x38] sm:$0xff]
    %v116 = vld [vmem:[%s107 + $0x40] sm:$0xff]
    %v117 = vld [vmem:[%s107 + $0x48] sm:$0xff]
    %v118 = vld [vmem:[%s107 + $0x50] sm:$0xff]
    %v119 = vld [vmem:[%s107 + $0x58] sm:$0xff]
    %v120 = vld [vmem:[%s107 + $0x60] sm:$0xff]
    %v121 = vld [vmem:[%s107 + $0x68] sm:$0xff]
    %v122 = vld [vmem:[%s107 + $0x70] sm:$0xff]
    %v123 = vld [vmem:[%s107 + $0x78] sm:$0xff]
    %v124 = vadd.f32 %v91, %v108
    %v125 = vadd.f32 %v92, %v109
    %v126 = vadd.f32 %v93, %v110
    %v127 = vadd.f32 %v94, %v111
    %v128 = vadd.f32 %v95, %v112
    %v129 = vadd.f32 %v96, %v113
    %v130 = vadd.f32 %v97, %v114
    %v131 = vadd.f32 %v98, %v115
    %v132 = vadd.f32 %v99, %v116
    %v133 = vadd.f32 %v100, %v117
    %v134 = vadd.f32 %v101, %v118
    %v135 = vadd.f32 %v102, %v119
    %v136 = vadd.f32 %v103, %v120
    %v137 = vadd.f32 %v104, %v121
    %v138 = vadd.f32 %v105, %v122
    %v139 = vadd.f32 %v106, %v123
    %v140 = vld [vmem:[#allocation2] sm:$0xff]
    %v141 = vld [vmem:[#allocation5] sm:$0xff]
    %vm142 = vcmask 64512
    %v144 = vsel %vm142, %v140, 0
    %146 = vmatpush.msra.mxu0 0.0
    %147 = vmatpush.msra.mxu0 0.0
    %148 = vmatpush.msra.mxu0 0.0
    %149 = vmatpush.msra.mxu0 0.0
    %150 = vmatpush.msra.mxu0 0.0
    %151 = vmatpush.msra.mxu0 0.0
    %152 = vmatpush.msra.mxu0 0.0
    %153 = vmatpush.msra.mxu0 0.0
    %154 = vmatpush.msra.mxu0 0.0
    %155 = vmatpush.msra.mxu0 0.0
    %156 = vmatpush.msra.mxu0 0.0
    %157 = vmatpush.msra.mxu0 0.0
    %158 = vmatpush.msra.mxu0 0.0
    %159 = vmatpush.msra.mxu0 0.0
    %160 = vmatpush.msra.mxu0 0.0
    %161 = vmatpush.msra.mxu0 %v141
    %162 = vmatmul.f32.gmra.mxu0 %v144
    %v163 = vpop.f32.mrf.mxu0
    %v164 = vadd.f32 0.0, %v163
    %165 = vdwg.mxu0
    %166 = vmatpush.msra.mxu0 %v139
    %167 = vmatpush.msra.mxu0 %v138
    %168 = vmatpush.msra.mxu0 %v137
    %169 = vmatpush.msra.mxu0 %v136
    %170 = vmatpush.msra.mxu0 %v135
    %171 = vmatpush.msra.mxu0 %v134
    %172 = vmatpush.msra.mxu0 %v133
    %173 = vmatpush.msra.mxu0 %v132
    %174 = vmatpush.msra.mxu0 %v131
    %175 = vmatpush.msra.mxu0 %v130
    %176 = vmatpush.msra.mxu0 %v129
    %177 = vmatpush.msra.mxu0 %v128
    %178 = vmatpush.msra.mxu0 %v127
    %179 = vmatpush.msra.mxu0 %v126
    %180 = vmatpush.msra.mxu0 %v125
    %181 = vmatpush.msra.mxu0 %v124
    %182 = vmatmul.f32.gmra.mxu0 %v164
    %v183 = vpop.f32.mrf.mxu0
    %v184 = vadd.f32 0.0, %v183
    %185 = vdwg.mxu0
    %186 = vst [vmem:[#allocation8] sm:$0xff] %v184
    // Predicated region
    $region26: #{tpu_custom_call.1} parent=1 // pred_check
      _
    $region27: #{tpu_custom_call.1} parent=1 // pred_check_branch
      %188 = sbr.rel (0) target = $region29
    $region28: #{tpu_custom_call.1} parent=1 // pred_region
      %190 = vsyncadd [#allocation4], 0
      %s192 = sshll.u32 [#allocation8], 4
      %s193 = int_to_ptr.vmem [resolvable:$true] %s192
      %s194 = sshll.u32 %s3, 4
      %s195 = int_to_ptr.hbm [resolvable:$true] %s194
      %197 = dma.vmem_to_hbm [thread:$0]  %s193, 128, %s195, [#allocation4]
    $region29: #{tpu_custom_call.1} parent=1 // pred_fallthru
      _
    // Predicated region
    $region30: #{tpu_custom_call.1} parent=1 // pred_check
      _
    $region31: #{tpu_custom_call.1} parent=1 // pred_check_branch
      %199 = sbr.rel (0) target = $region33
    $region32: #{tpu_custom_call.1} parent=1 // pred_region
      %201 = dma.done [#allocation4], 128
    $region33: #{tpu_custom_call.1} parent=1 // pred_fallthru
      _
    %202 = vsyncpa [#allocation3], 1
    %203 = vsyncpa [#allocation6], 1
    %204 = vsyncpa [#allocation4], 1

</llo_original>
